<compile_context>
chip_gen: v7x
topology: tpu7x:2x2x1
jax: 0.10.0
libtpu: 0.0.40
codegen_flags: <defaults>
</compile_context>

<pallas_src>
import functools

import jax
import jax.numpy as jnp
from jax.experimental import pallas as pl
from jax.experimental.pallas import tpu as pltpu


def _l_spa_kernel(org_ref, enh_ref, pwt_ref, ph_ref, mwl_ref, mwr_ref,
                  mhu_ref, mhd_ref, e_ref, *, bt, ch):
    """One grid step processes `bt` images.

    org_ref/enh_ref : (bt*C*H, W)  native dtype, rows ordered (b, c, h)
    pwt_ref         : (W, Wp)      native dtype, 0/1 entries (W-patch sum)
    ph_ref          : (Hp, C*H)    f32, entries 1/(C*patch^2) (C + H-patch mean)
    mwl/mwr_ref     : (Wp, Wp)     f32 directional differences (right-multiply)
    mhu/mhd_ref     : (Hp, Hp)     f32 directional differences (left-multiply)
    e_ref           : (bt, Hp, Wp) f32 output block
    """
    pwt = pwt_ref[...]
    # --- full-resolution stage: two batched native-dtype MXU matmuls ---------
    xw = jnp.dot(org_ref[...], pwt, preferred_element_type=jnp.float32)
    yw = jnp.dot(enh_ref[...], pwt, preferred_element_type=jnp.float32)
    dw = xw - yw                                   # (bt*C*H, Wp) f32, quarter-res

    ph = ph_ref[...]
    mwl = mwl_ref[...]
    mwr = mwr_ref[...]
    mhu = mhu_ref[...]
    mhd = mhd_ref[...]

    # --- quarter-resolution tail: tiny per-image matmuls (bt <= 8) -----------
    for b in range(bt):
        dwb = dw[b * ch:(b + 1) * ch, :]                                  # (C*H, Wp)
        d = jnp.dot(ph, dwb, preferred_element_type=jnp.float32)          # (Hp, Wp)
        a_l = jnp.dot(d, mwl, preferred_element_type=jnp.float32)
        a_r = jnp.dot(d, mwr, preferred_element_type=jnp.float32)
        a_u = jnp.dot(mhu, d, preferred_element_type=jnp.float32)
        a_d = jnp.dot(mhd, d, preferred_element_type=jnp.float32)
        e_ref[b] = a_l * a_l + a_r * a_r + a_u * a_u + a_d * a_d


def l_spa(org, enhance, patch_size=4, block_batch=None):
    """Zero-DCE spatial consistency loss map. Returns (B, 1, H/p, W/p) float32."""
    B, C, H, W = org.shape
    assert enhance.shape == org.shape
    assert enhance.dtype == org.dtype
    assert H % patch_size == 0 and W % patch_size == 0
    Hp, Wp = H // patch_size, W // patch_size
    CH = C * H
    itemsize = jnp.dtype(org.dtype).itemsize
    sub = {4: 8, 2: 16, 1: 32}.get(itemsize, 8)     # sublane tile for this dtype

    # ---- generation-aware VMEM budget --------------------------------------
    try:
        vmem_cap = int(pltpu.get_tpu_info().vmem_capacity_bytes)
    except Exception:
        vmem_cap = 64 * 1024 * 1024                 # conservative (v7x per-TC)
    vmem_limit = min(vmem_cap * 3 // 4, 112 * 1024 * 1024)   # ~48 MiB v7x, ~96 MiB v5e/v6e

    # Per-step VMEM per image: 2 inputs x 2 pipeline buffers (native dtype)
    # + ~4 quarter-res f32 intermediates (xw, yw, dw + slack).
    per_image_step_bytes = 4 * C * H * W * itemsize + 4 * C * H * Wp * 4
    budget = max(vmem_limit - 6 * 1024 * 1024, per_image_step_bytes)

    # ---- pick images-per-step (bt) ------------------------------------------
    if block_batch is not None:
        bt_cap = max(1, min(int(block_batch), B))
    else:
        bt_cap = max(1, budget // per_image_step_bytes)
        bt_cap = min(bt_cap, 8)                     # bound the quarter-res unroll
        if B >= 2:
            bt_cap = min(bt_cap, (B + 1) // 2)      # keep >= 2 grid steps (v7x: 2 TCs)
        bt_cap = max(1, min(bt_cap, B))

    # (8,128) BlockSpec rule: a batch-blocked input needs (bt*C*H) % sub == 0.
    if CH % sub != 0 and bt_cap < B:
        # TODO(synk): an H-stripe grid axis would avoid this full-batch fallback.
        bt_cap = B

    # Prefer a divisor of B (no padding); pad the batch only if the best
    # divisor would shrink the block by more than 2x.
    def _largest_divisor_leq(n, cap):
        for d in range(min(n, cap), 0, -1):
            if n % d == 0:
                return d
        return 1

    div = _largest_divisor_leq(B, bt_cap)
    if 2 * div >= bt_cap:
        bt, pad = div, 0
    else:
        bt, pad = bt_cap, (-B) % bt_cap
    Bp = B + pad

    if pad:
        org_p = jnp.pad(org, ((0, pad), (0, 0), (0, 0), (0, 0)))
        enh_p = jnp.pad(enhance, ((0, pad), (0, 0), (0, 0), (0, 0)))
    else:
        org_p, enh_p = org, enhance

    # Lane-dense 2D streaming view (free reshape of a contiguous array).
    org2 = org_p.reshape(Bp * C * H, W)
    enh2 = enh_p.reshape(Bp * C * H, W)

    # ---- constant matrices ---------------------------------------------------
    f32 = jnp.float32
    # W-patch summation (0/1 entries, exact in any dtype) -> native dtype.
    pwt = jnp.repeat(jnp.eye(Wp, dtype=f32), patch_size, axis=1).T.astype(org.dtype)  # (W, Wp)
    # Channel + H-patch mean with the full 1/(C*patch^2) scale folded in (f32).
    base_h = jnp.repeat(jnp.eye(Hp, dtype=f32), patch_size, axis=1)                   # (Hp, H)
    ph = jnp.tile(base_h, (1, C)) * f32(1.0 / (C * patch_size * patch_size))          # (Hp, C*H)
    # Directional first differences (zero padding consistent with conv pad=1).
    eye_h = jnp.eye(Hp, dtype=f32)
    eye_w = jnp.eye(Wp, dtype=f32)
    mwl = eye_w - jnp.eye(Wp, k=1, dtype=f32)    # cols: d[j] - d[j-1]
    mwr = eye_w - jnp.eye(Wp, k=-1, dtype=f32)   # cols: d[j] - d[j+1]
    mhu = eye_h - jnp.eye(Hp, k=-1, dtype=f32)   # rows: d[i] - d[i-1]
    mhd = eye_h - jnp.eye(Hp, k=1, dtype=f32)    # rows: d[i] - d[i+1]

    flops = int(
        4 * Bp * C * H * W * Wp               # two full-res W-pool matmuls
        + 2 * Bp * Hp * CH * Wp               # H/C pooling matmuls
        + 8 * Bp * Hp * Wp * max(Hp, Wp)      # four directional matmuls
        + 12 * Bp * Hp * Wp)                  # diff + squares + sums
    bytes_accessed = int(2 * Bp * C * H * W * itemsize + Bp * Hp * Wp * 4)
    cost = pl.CostEstimate(flops=flops, transcendentals=0,
                           bytes_accessed=bytes_accessed)

    kernel = functools.partial(_l_spa_kernel, bt=bt, ch=CH)

    out = pl.pallas_call(
        kernel,
        out_shape=jax.ShapeDtypeStruct((Bp, Hp, Wp), jnp.float32),
        grid_spec=pltpu.PrefetchScalarGridSpec(
            num_scalar_prefetch=0,
            grid=(Bp // bt,),
            in_specs=[
                pl.BlockSpec((bt * C * H, W), lambda i: (i, 0)),
                pl.BlockSpec((bt * C * H, W), lambda i: (i, 0)),
                pl.BlockSpec((W, Wp), lambda i: (0, 0)),
                pl.BlockSpec((Hp, CH), lambda i: (0, 0)),
                pl.BlockSpec((Wp, Wp), lambda i: (0, 0)),
                pl.BlockSpec((Wp, Wp), lambda i: (0, 0)),
                pl.BlockSpec((Hp, Hp), lambda i: (0, 0)),
                pl.BlockSpec((Hp, Hp), lambda i: (0, 0)),
            ],
            out_specs=pl.BlockSpec((bt, Hp, Wp), lambda i: (i, 0, 0)),
        ),
        compiler_params=pltpu.CompilerParams(
            dimension_semantics=("parallel",),    # each step owns its output block
            vmem_limit_bytes=int(vmem_limit),
        ),
        cost_estimate=cost,
    )(org2, enh2, pwt, ph, mwl, mwr, mhu, mhd)

    return out[:B].reshape(B, 1, Hp, Wp)


def l_spa_reference(org, enhance, patch_size=4):
    """Pure-JAX reference that mirrors the PyTorch module op-by-op."""
    org = org.astype(jnp.float32)
    enhance = enhance.astype(jnp.float32)
    org_mean = jnp.mean(org, axis=1, keepdims=True)
    enh_mean = jnp.mean(enhance, axis=1, keepdims=True)

    def pool(x):
        B, _, H, W = x.shape
        return x.reshape(B, 1, H // patch_size, patch_size,
                         W // patch_size, patch_size).mean(axis=(3, 5))

    org_pool = pool(org_mean)
    enh_pool = pool(enh_mean)

    def dir_diffs(x):
        # 3x3 directional convs with padding=1 reduce to neighbour differences.
        xp = jnp.pad(x, ((0, 0), (0, 0), (1, 1), (1, 1)))
        left = x - xp[:, :, 1:-1, 0:-2]
        right = x - xp[:, :, 1:-1, 2:]
        up = x - xp[:, :, 0:-2, 1:-1]
        down = x - xp[:, :, 2:, 1:-1]
        return left, right, up, down

    ol, orr, ou, od = dir_diffs(org_pool)
    el, er, eu, ed = dir_diffs(enh_pool)
    return ((ol - el) ** 2 + (orr - er) ** 2 + (ou - eu) ** 2 + (od - ed) ** 2)


if __name__ == "__main__":
    key = jax.random.PRNGKey(0)
    B, C, H, W = 2, 3, 16, 16
    patch_size = 4

    k_org, k_enh = jax.random.split(key)
    org = jax.random.uniform(k_org, (B, C, H, W), dtype=jnp.float32)
    enhance = jax.random.uniform(k_enh, (B, C, H, W), dtype=jnp.float32)
    # Snap inputs to the bf16 grid so the full-resolution MXU matmul is exact
    # regardless of the MXU's f32 pass strategy; tolerance below still leaves
    # headroom for the small f32 pooling/directional matmuls.
    org = org.astype(jnp.bfloat16).astype(jnp.float32)
    enhance = enhance.astype(jnp.bfloat16).astype(jnp.float32)

    out = l_spa(org, enhance, patch_size=patch_size)
    jax.block_until_ready(out)

    ref = l_spa_reference(org, enhance, patch_size=patch_size)
    assert out.shape == (B, 1, H // patch_size, W // patch_size), out.shape
    max_err = float(jnp.max(jnp.abs(out - ref)))
    assert jnp.allclose(out, ref, rtol=2e-2, atol=5e-3), max_err

    print("KERNEL_OK")
</pallas_src>

<mosaic_0001>
module attributes {stable_mosaic.version = 11 : i64} {
  func.func @_l_spa_kernel(%arg0: i32, %arg1: memref<48x16xf32, #tpu.memory_space<vmem>>, %arg2: memref<48x16xf32, #tpu.memory_space<vmem>>, %arg3: memref<16x4xf32, #tpu.memory_space<vmem>>, %arg4: memref<4x48xf32, #tpu.memory_space<vmem>>, %arg5: memref<4x4xf32, #tpu.memory_space<vmem>>, %arg6: memref<4x4xf32, #tpu.memory_space<vmem>>, %arg7: memref<4x4xf32, #tpu.memory_space<vmem>>, %arg8: memref<4x4xf32, #tpu.memory_space<vmem>>, %arg9: memref<1x4x4xf32, #tpu.memory_space<vmem>>) attributes {dimension_semantics = [#tpu.dimension_semantics<parallel>], iteration_bounds = array<i64: 2>, scalar_prefetch = 0 : i64, scratch_operands = 0 : i64, tpu.core_type = #tpu.core_type<tc>, window_params = [{transform_indices = @transform_0, window_bounds = array<i64: 48, 16>}, {transform_indices = @transform_1, window_bounds = array<i64: 48, 16>}, {pipeline_mode = #tpu.pipeline_mode<synchronous>, transform_indices = @transform_2, window_bounds = array<i64: 16, 4>}, {pipeline_mode = #tpu.pipeline_mode<synchronous>, transform_indices = @transform_3, window_bounds = array<i64: 4, 48>}, {pipeline_mode = #tpu.pipeline_mode<synchronous>, transform_indices = @transform_4, window_bounds = array<i64: 4, 4>}, {pipeline_mode = #tpu.pipeline_mode<synchronous>, transform_indices = @transform_5, window_bounds = array<i64: 4, 4>}, {pipeline_mode = #tpu.pipeline_mode<synchronous>, transform_indices = @transform_6, window_bounds = array<i64: 4, 4>}, {pipeline_mode = #tpu.pipeline_mode<synchronous>, transform_indices = @transform_7, window_bounds = array<i64: 4, 4>}, {transform_indices = @transform_8, window_bounds = array<i64: 1, 4, 4>}]} {
    %c0 = arith.constant 0 : index
    %c0_0 = arith.constant 0 : index
    %0 = vector.load %arg3[%c0, %c0_0] : memref<16x4xf32, #tpu.memory_space<vmem>>, vector<16x4xf32>
    %c0_1 = arith.constant 0 : index
    %c0_2 = arith.constant 0 : index
    %1 = vector.load %arg1[%c0_1, %c0_2] : memref<48x16xf32, #tpu.memory_space<vmem>>, vector<48x16xf32>
    %cst = arith.constant dense<0.000000e+00> : vector<48x4xf32>
    %2 = tpu.matmul %1, %0, %cst {dimension_numbers = #tpu.dot_dimension_numbers<[1], [0], [0], [1], [0, 0, 1, 1], [], []>} : vector<48x16xf32>, vector<16x4xf32>, vector<48x4xf32> -> vector<48x4xf32>
    %c0_3 = arith.constant 0 : index
    %c0_4 = arith.constant 0 : index
    %3 = vector.load %arg2[%c0_3, %c0_4] : memref<48x16xf32, #tpu.memory_space<vmem>>, vector<48x16xf32>
    %cst_5 = arith.constant dense<0.000000e+00> : vector<48x4xf32>
    %4 = tpu.matmul %3, %0, %cst_5 {dimension_numbers = #tpu.dot_dimension_numbers<[1], [0], [0], [1], [0, 0, 1, 1], [], []>} : vector<48x16xf32>, vector<16x4xf32>, vector<48x4xf32> -> vector<48x4xf32>
    %5 = arith.subf %2, %4 : vector<48x4xf32>
    %c0_6 = arith.constant 0 : index
    %c0_7 = arith.constant 0 : index
    %6 = vector.load %arg4[%c0_6, %c0_7] : memref<4x48xf32, #tpu.memory_space<vmem>>, vector<4x48xf32>
    %c0_8 = arith.constant 0 : index
    %c0_9 = arith.constant 0 : index
    %7 = vector.load %arg5[%c0_8, %c0_9] : memref<4x4xf32, #tpu.memory_space<vmem>>, vector<4x4xf32>
    %c0_10 = arith.constant 0 : index
    %c0_11 = arith.constant 0 : index
    %8 = vector.load %arg6[%c0_10, %c0_11] : memref<4x4xf32, #tpu.memory_space<vmem>>, vector<4x4xf32>
    %c0_12 = arith.constant 0 : index
    %c0_13 = arith.constant 0 : index
    %9 = vector.load %arg7[%c0_12, %c0_13] : memref<4x4xf32, #tpu.memory_space<vmem>>, vector<4x4xf32>
    %c0_14 = arith.constant 0 : index
    %c0_15 = arith.constant 0 : index
    %10 = vector.load %arg8[%c0_14, %c0_15] : memref<4x4xf32, #tpu.memory_space<vmem>>, vector<4x4xf32>
    %cst_16 = arith.constant dense<0.000000e+00> : vector<4x4xf32>
    %11 = tpu.matmul %6, %5, %cst_16 {dimension_numbers = #tpu.dot_dimension_numbers<[1], [0], [0], [1], [0, 0, 1, 1], [], []>} : vector<4x48xf32>, vector<48x4xf32>, vector<4x4xf32> -> vector<4x4xf32>
    %cst_17 = arith.constant dense<0.000000e+00> : vector<4x4xf32>
    %12 = tpu.matmul %11, %7, %cst_17 {dimension_numbers = #tpu.dot_dimension_numbers<[1], [0], [0], [1], [0, 0, 1, 1], [], []>} : vector<4x4xf32>, vector<4x4xf32>, vector<4x4xf32> -> vector<4x4xf32>
    %cst_18 = arith.constant dense<0.000000e+00> : vector<4x4xf32>
    %13 = tpu.matmul %11, %8, %cst_18 {dimension_numbers = #tpu.dot_dimension_numbers<[1], [0], [0], [1], [0, 0, 1, 1], [], []>} : vector<4x4xf32>, vector<4x4xf32>, vector<4x4xf32> -> vector<4x4xf32>
    %cst_19 = arith.constant dense<0.000000e+00> : vector<4x4xf32>
    %14 = tpu.matmul %9, %11, %cst_19 {dimension_numbers = #tpu.dot_dimension_numbers<[1], [0], [0], [1], [0, 0, 1, 1], [], []>} : vector<4x4xf32>, vector<4x4xf32>, vector<4x4xf32> -> vector<4x4xf32>
    %cst_20 = arith.constant dense<0.000000e+00> : vector<4x4xf32>
    %15 = tpu.matmul %10, %11, %cst_20 {dimension_numbers = #tpu.dot_dimension_numbers<[1], [0], [0], [1], [0, 0, 1, 1], [], []>} : vector<4x4xf32>, vector<4x4xf32>, vector<4x4xf32> -> vector<4x4xf32>
    %16 = arith.mulf %12, %12 : vector<4x4xf32>
    %17 = arith.mulf %13, %13 : vector<4x4xf32>
    %18 = arith.addf %16, %17 : vector<4x4xf32>
    %19 = arith.mulf %14, %14 : vector<4x4xf32>
    %20 = arith.addf %18, %19 : vector<4x4xf32>
    %21 = arith.mulf %15, %15 : vector<4x4xf32>
    %22 = arith.addf %20, %21 : vector<4x4xf32>
    %c0_21 = arith.constant 0 : index
    %c0_22 = arith.constant 0 : index
    %c0_23 = arith.constant 0 : index
    %23 = vector.load %arg9[%c0_21, %c0_22, %c0_23] : memref<1x4x4xf32, #tpu.memory_space<vmem>>, vector<1x4x4xf32>
    %24 = vector.shape_cast %23 : vector<1x4x4xf32> to vector<4x4xf32>
    %25 = vector.shape_cast %22 : vector<4x4xf32> to vector<1x4x4xf32>
    tpu.vector_store %arg9[%c0_21, %c0_22, %c0_23], %25 {strides = array<i32>} : memref<1x4x4xf32, #tpu.memory_space<vmem>>, vector<1x4x4xf32>,
    return
  }
  func.func @transform_0(%arg0: i32) -> (i32, i32) {
    %c0_i32 = arith.constant 0 : i32
    %c0_i32_0 = arith.constant 0 : i32
    return %arg0, %c0_i32 : i32, i32
  }
  func.func @transform_1(%arg0: i32) -> (i32, i32) {
    %c0_i32 = arith.constant 0 : i32
    %c0_i32_0 = arith.constant 0 : i32
    return %arg0, %c0_i32 : i32, i32
  }
  func.func @transform_2(%arg0: i32) -> (i32, i32) {
    %c0_i32 = arith.constant 0 : i32
    %c0_i32_0 = arith.constant 0 : i32
    %c0_i32_1 = arith.constant 0 : i32
    return %c0_i32, %c0_i32_0 : i32, i32
  }
  func.func @transform_3(%arg0: i32) -> (i32, i32) {
    %c0_i32 = arith.constant 0 : i32
    %c0_i32_0 = arith.constant 0 : i32
    %c0_i32_1 = arith.constant 0 : i32
    return %c0_i32, %c0_i32_0 : i32, i32
  }
  func.func @transform_4(%arg0: i32) -> (i32, i32) {
    %c0_i32 = arith.constant 0 : i32
    %c0_i32_0 = arith.constant 0 : i32
    %c0_i32_1 = arith.constant 0 : i32
    return %c0_i32, %c0_i32_0 : i32, i32
  }
  func.func @transform_5(%arg0: i32) -> (i32, i32) {
    %c0_i32 = arith.constant 0 : i32
    %c0_i32_0 = arith.constant 0 : i32
    %c0_i32_1 = arith.constant 0 : i32
    return %c0_i32, %c0_i32_0 : i32, i32
  }
  func.func @transform_6(%arg0: i32) -> (i32, i32) {
    %c0_i32 = arith.constant 0 : i32
    %c0_i32_0 = arith.constant 0 : i32
    %c0_i32_1 = arith.constant 0 : i32
    return %c0_i32, %c0_i32_0 : i32, i32
  }
  func.func @transform_7(%arg0: i32) -> (i32, i32) {
    %c0_i32 = arith.constant 0 : i32
    %c0_i32_0 = arith.constant 0 : i32
    %c0_i32_1 = arith.constant 0 : i32
    return %c0_i32, %c0_i32_0 : i32, i32
  }
  func.func @transform_8(%arg0: i32) -> (i32, i32, i32) {
    %c0_i32 = arith.constant 0 : i32
    %c0_i32_0 = arith.constant 0 : i32
    %c0_i32_1 = arith.constant 0 : i32
    return %arg0, %c0_i32, %c0_i32_0 : i32, i32, i32
  }
}

</mosaic_0001>

<llo_original>
// kernel: tpu_custom_call.1
$region0: #{tpu_custom_call.1}
  #allocation0 [shape = 'u32[]', space=smem, size = 0x4, offset = 0x4, fixed_abs, tag = 'smem constant byte address 0x4 - core index']
  #allocation1 [shape = 'u32[144,128]{1,0:T(1,128)}', space=vmem, size = 0x12000, scoped, tag = 'internal scratch']
  %s0 = inlined_call_operand.vmem [shape: f32[96,16], index: 0, kind: input, shape index: {}]
  %s1 = inlined_call_operand.vmem [shape: f32[96,16], index: 1, kind: input, shape index: {}]
  %s2 = inlined_call_operand.vmem [shape: f32[16,4], index: 2, kind: input, shape index: {}]
  %s3 = inlined_call_operand.vmem [shape: f32[4,48], index: 3, kind: input, shape index: {}]
  %s4 = inlined_call_operand.vmem [shape: f32[4,4], index: 4, kind: input, shape index: {}]
  %s5 = inlined_call_operand.vmem [shape: f32[4,4], index: 5, kind: input, shape index: {}]
  %s6 = inlined_call_operand.vmem [shape: f32[4,4], index: 6, kind: input, shape index: {}]
  %s7 = inlined_call_operand.vmem [shape: f32[4,4], index: 7, kind: input, shape index: {}]
  %s8 = inlined_call_operand.hbm [shape: f32[2,4,4], index: 8, kind: output, shape index: {}]
  %s9 = sld [smem:[#allocation0]]
  $region65: #{tpu_custom_call.1} parent=0
    _
  %s11 = ssub.s32 1, %s9
  %s12 = scalar_select 0, %s11, %s9
  $region1: #{tpu_custom_call.1} parent=0
    #allocation2 [shape = 'u8[4096]{0}', space=vmem, size = 0x1000, scoped, tag = 'output window, operand 0']
    #allocation3 [shape = 's32[2]{0}', space=sflag, size = 0x8, scoped, tag = 'scoped memory for tpu_custom_call.1']
    %13 = vsyncpa [#allocation3], 0
    %s14 = scalar_lea.sflag [#allocation3], 1
    %15 = vsyncpa %s14, 0
    loop: start=0, step=1, limit=4
    $region2: #{tpu_custom_call.1} parent=1 // loop_pre_header
      _
    $region3: #{tpu_custom_call.1} parent=1 // loop_header
      %s17 = sphi 0, %s21
      %p18 = scmp.ge.s32.totalorder %s17, 4
      %s27 = sphi 0, %s29
      %s30 = sphi 0, %s27
      %s31 = sphi 0, %s30
      %s47 = sphi 0, %s31
      %s53 = sphi 0, %s55
      %s56 = sphi 0, %s53
      %s57 = sphi 0, %s56
      %s73 = sphi 0, %s57
      %s77 = sphi 0, %s77
      %s79 = sphi 0, %s77
      %s80 = sphi 0, %s79
      %s94 = sphi 0, %s80
      %s98 = sphi 0, %s98
      %s100 = sphi 0, %s98
      %s101 = sphi 0, %s100
      %s115 = sphi 0, %s101
      %s119 = sphi 0, %s119
      %s121 = sphi 0, %s119
      %s122 = sphi 0, %s121
      %s136 = sphi 0, %s122
      %s140 = sphi 0, %s140
      %s142 = sphi 0, %s140
      %s143 = sphi 0, %s142
      %s157 = sphi 0, %s143
      %s161 = sphi 0, %s161
      %s163 = sphi 0, %s161
      %s164 = sphi 0, %s163
      %s178 = sphi 0, %s164
      %s182 = sphi 0, %s182
      %s184 = sphi 0, %s182
      %s185 = sphi 0, %s184
      %s199 = sphi 0, %s185
      %s205 = sphi 0, %s207
      %s208 = sphi 0, %s205
      %s209 = sphi 0, %s208
      %s225 = sphi 0, %s209
    $region4: #{tpu_custom_call.1} parent=1 // loop_header_branch
      %20 = sbr.rel (%p18) target = $region8
    $region5: #{tpu_custom_call.1} parent=1 // loop_body
      %s22 = ssub.s32 %s17, 1
      %s23 = ssub.s32 %s17, 2
      %s24 = sadd.s32 %s17, 1
      %s25 = ssub.s32 %s17, %s24
      %p26 = scmp.eq.s32.totalorder %s25, 0
      %s28 = sadd.s32 %s27, 1
      %s29 = scalar_select %p26, %s27, %s28
      %p32 = pneg %p26
      %p33 = scmp.eq.s32.totalorder %s17, 1
      %p34 = por %p32, %p33
      %p35 = scmp.ne.s32.totalorder %s27, %s30
      %p36 = scmp.eq.s32.totalorder %s17, 0
      %p37 = por %p35, %p36
      %p38 = scmp.ne.s32.totalorder %s27, %s30
      %p39 = scmp.eq.s32.totalorder %s22, 1
      %p40 = por %p38, %p39
      %p41 = scmp.ne.s32.totalorder %s30, %s31
      %p42 = scmp.eq.s32.totalorder %s22, 0
      %p43 = por %p41, %p42
      %p44 = scmp.ne.s32.totalorder %s30, %s31
      %p45 = scmp.eq.s32.totalorder %s23, 1
      %p46 = por %p44, %p45
      %p48 = scmp.ne.s32.totalorder %s31, %s47
      %p49 = scmp.eq.s32.totalorder %s23, 0
      %p50 = por %p48, %p49
      %s51 = ssub.s32 %s17, %s24
      %p52 = scmp.eq.s32.totalorder %s51, 0
      %s54 = sadd.s32 %s53, 1
      %s55 = scalar_select %p52, %s53, %s54
      %p58 = pneg %p52
      %p59 = scmp.eq.s32.totalorder %s17, 1
      %p60 = por %p58, %p59
      %p61 = scmp.ne.s32.totalorder %s53, %s56
      %p62 = scmp.eq.s32.totalorder %s17, 0
      %p63 = por %p61, %p62
      %p64 = scmp.ne.s32.totalorder %s53, %s56
      %p65 = scmp.eq.s32.totalorder %s22, 1
      %p66 = por %p64, %p65
      %p67 = scmp.ne.s32.totalorder %s56, %s57
      %p68 = scmp.eq.s32.totalorder %s22, 0
      %p69 = por %p67, %p68
      %p70 = scmp.ne.s32.totalorder %s56, %s57
      %p71 = scmp.eq.s32.totalorder %s23, 1
      %p72 = por %p70, %p71
      %p74 = scmp.ne.s32.totalorder %s57, %s73
      %p75 = scmp.eq.s32.totalorder %s23, 0
      %p76 = por %p74, %p75
      %s78 = sadd.s32 %s77, 1
      %p81 = scmp.eq.s32.totalorder %s17, 1
      %p82 = scmp.ne.s32.totalorder %s77, %s79
      %p83 = scmp.eq.s32.totalorder %s17, 0
      %p84 = por %p82, %p83
      %p85 = scmp.ne.s32.totalorder %s77, %s79
      %p86 = scmp.eq.s32.totalorder %s22, 1
      %p87 = por %p85, %p86
      %p88 = scmp.ne.s32.totalorder %s79, %s80
      %p89 = scmp.eq.s32.totalorder %s22, 0
      %p90 = por %p88, %p89
      %p91 = scmp.ne.s32.totalorder %s79, %s80
      %p92 = scmp.eq.s32.totalorder %s23, 1
      %p93 = por %p91, %p92
      %p95 = scmp.ne.s32.totalorder %s80, %s94
      %p96 = scmp.eq.s32.totalorder %s23, 0
      %p97 = por %p95, %p96
      %s99 = sadd.s32 %s98, 1
      %p102 = scmp.eq.s32.totalorder %s17, 1
      %p103 = scmp.ne.s32.totalorder %s98, %s100
      %p104 = scmp.eq.s32.totalorder %s17, 0
      %p105 = por %p103, %p104
      %p106 = scmp.ne.s32.totalorder %s98, %s100
      %p107 = scmp.eq.s32.totalorder %s22, 1
      %p108 = por %p106, %p107
      %p109 = scmp.ne.s32.totalorder %s100, %s101
      %p110 = scmp.eq.s32.totalorder %s22, 0
      %p111 = por %p109, %p110
      %p112 = scmp.ne.s32.totalorder %s100, %s101
      %p113 = scmp.eq.s32.totalorder %s23, 1
      %p114 = por %p112, %p113
      %p116 = scmp.ne.s32.totalorder %s101, %s115
      %p117 = scmp.eq.s32.totalorder %s23, 0
      %p118 = por %p116, %p117
      %s120 = sadd.s32 %s119, 1
      %p123 = scmp.eq.s32.totalorder %s17, 1
      %p124 = scmp.ne.s32.totalorder %s119, %s121
      %p125 = scmp.eq.s32.totalorder %s17, 0
      %p126 = por %p124, %p125
      %p127 = scmp.ne.s32.totalorder %s119, %s121
      %p128 = scmp.eq.s32.totalorder %s22, 1
      %p129 = por %p127, %p128
      %p130 = scmp.ne.s32.totalorder %s121, %s122
      %p131 = scmp.eq.s32.totalorder %s22, 0
      %p132 = por %p130, %p131
      %p133 = scmp.ne.s32.totalorder %s121, %s122
      %p134 = scmp.eq.s32.totalorder %s23, 1
      %p135 = por %p133, %p134
      %p137 = scmp.ne.s32.totalorder %s122, %s136
      %p138 = scmp.eq.s32.totalorder %s23, 0
      %p139 = por %p137, %p138
      %s141 = sadd.s32 %s140, 1
      %p144 = scmp.eq.s32.totalorder %s17, 1
      %p145 = scmp.ne.s32.totalorder %s140, %s142
      %p146 = scmp.eq.s32.totalorder %s17, 0
      %p147 = por %p145, %p146
      %p148 = scmp.ne.s32.totalorder %s140, %s142
      %p149 = scmp.eq.s32.totalorder %s22, 1
      %p150 = por %p148, %p149
      %p151 = scmp.ne.s32.totalorder %s142, %s143
      %p152 = scmp.eq.s32.totalorder %s22, 0
      %p153 = por %p151, %p152
      %p154 = scmp.ne.s32.totalorder %s142, %s143
      %p155 = scmp.eq.s32.totalorder %s23, 1
      %p156 = por %p154, %p155
      %p158 = scmp.ne.s32.totalorder %s143, %s157
      %p159 = scmp.eq.s32.totalorder %s23, 0
      %p160 = por %p158, %p159
      %s162 = sadd.s32 %s161, 1
      %p165 = scmp.eq.s32.totalorder %s17, 1
      %p166 = scmp.ne.s32.totalorder %s161, %s163
      %p167 = scmp.eq.s32.totalorder %s17, 0
      %p168 = por %p166, %p167
      %p169 = scmp.ne.s32.totalorder %s161, %s163
      %p170 = scmp.eq.s32.totalorder %s22, 1
      %p171 = por %p169, %p170
      %p172 = scmp.ne.s32.totalorder %s163, %s164
      %p173 = scmp.eq.s32.totalorder %s22, 0
      %p174 = por %p172, %p173
      %p175 = scmp.ne.s32.totalorder %s163, %s164
      %p176 = scmp.eq.s32.totalorder %s23, 1
      %p177 = por %p175, %p176
      %p179 = scmp.ne.s32.totalorder %s164, %s178
      %p180 = scmp.eq.s32.totalorder %s23, 0
      %p181 = por %p179, %p180
      %s183 = sadd.s32 %s182, 1
      %p186 = scmp.eq.s32.totalorder %s17, 1
      %p187 = scmp.ne.s32.totalorder %s182, %s184
      %p188 = scmp.eq.s32.totalorder %s17, 0
      %p189 = por %p187, %p188
      %p190 = scmp.ne.s32.totalorder %s182, %s184
      %p191 = scmp.eq.s32.totalorder %s22, 1
      %p192 = por %p190, %p191
      %p193 = scmp.ne.s32.totalorder %s184, %s185
      %p194 = scmp.eq.s32.totalorder %s22, 0
      %p195 = por %p193, %p194
      %p196 = scmp.ne.s32.totalorder %s184, %s185
      %p197 = scmp.eq.s32.totalorder %s23, 1
      %p198 = por %p196, %p197
      %p200 = scmp.ne.s32.totalorder %s185, %s199
      %p201 = scmp.eq.s32.totalorder %s23, 0
      %p202 = por %p200, %p201
      %s203 = ssub.s32 %s17, %s24
      %p204 = scmp.eq.s32.totalorder %s203, 0
      %s206 = sadd.s32 %s205, 1
      %s207 = scalar_select %p204, %s205, %s206
      %p210 = pneg %p204
      %p211 = scmp.eq.s32.totalorder %s17, 1
      %p212 = por %p210, %p211
      %p213 = scmp.ne.s32.totalorder %s205, %s208
      %p214 = scmp.eq.s32.totalorder %s17, 0
      %p215 = por %p213, %p214
      %p216 = scmp.ne.s32.totalorder %s205, %s208
      %p217 = scmp.eq.s32.totalorder %s22, 1
      %p218 = por %p216, %p217
      %p219 = scmp.ne.s32.totalorder %s208, %s209
      %p220 = scmp.eq.s32.totalorder %s22, 0
      %p221 = por %p219, %p220
      %p222 = scmp.ne.s32.totalorder %s208, %s209
      %p223 = scmp.eq.s32.totalorder %s23, 1
      %p224 = por %p222, %p223
      %p226 = scmp.ne.s32.totalorder %s209, %s225
      %p227 = scmp.eq.s32.totalorder %s23, 0
      %p228 = por %p226, %p227
      %p229 = scmp.le.s32.totalorder 1, %s17
      %p230 = scmp.lt.s32.totalorder %s17, 3
      %p231 = pnand %p229, %p230
      %p232 = pneg %p231
      // Predicated region
      $region9: #{tpu_custom_call.1} parent=5 // pred_check
        _
      $region10: #{tpu_custom_call.1} parent=5 // pred_check_branch
        %234 = sbr.rel (%p231) target = $region12
      $region11: #{tpu_custom_call.1} parent=5 // pred_region
        %s235 = ssub.s32 %s17, 1
        // Predicated region
        $region13: #{tpu_custom_call.1} parent=11 // pred_check
          %p236 = pneg %p90
        $region14: #{tpu_custom_call.1} parent=11 // pred_check_branch
          %238 = sbr.rel (%p236) target = $region16
        $region15: #{tpu_custom_call.1} parent=11 // pred_region
          _
        $region16: #{tpu_custom_call.1} parent=11 // pred_fallthru
          _
        // Predicated region
        $region17: #{tpu_custom_call.1} parent=11 // pred_check
          %p239 = pneg %p111
        $region18: #{tpu_custom_call.1} parent=11 // pred_check_branch
          %241 = sbr.rel (%p239) target = $region20
        $region19: #{tpu_custom_call.1} parent=11 // pred_region
          _
        $region20: #{tpu_custom_call.1} parent=11 // pred_fallthru
          _
        // Predicated region
        $region21: #{tpu_custom_call.1} parent=11 // pred_check
          %p242 = pneg %p132
        $region22: #{tpu_custom_call.1} parent=11 // pred_check_branch
          %244 = sbr.rel (%p242) target = $region24
        $region23: #{tpu_custom_call.1} parent=11 // pred_region
          _
        $region24: #{tpu_custom_call.1} parent=11 // pred_fallthru
          _
        // Predicated region
        $region25: #{tpu_custom_call.1} parent=11 // pred_check
          %p245 = pneg %p153
        $region26: #{tpu_custom_call.1} parent=11 // pred_check_branch
          %247 = sbr.rel (%p245) target = $region28
        $region27: #{tpu_custom_call.1} parent=11 // pred_region
          _
        $region28: #{tpu_custom_call.1} parent=11 // pred_fallthru
          _
        // Predicated region
        $region29: #{tpu_custom_call.1} parent=11 // pred_check
          %p248 = pneg %p174
        $region30: #{tpu_custom_call.1} parent=11 // pred_check_branch
          %250 = sbr.rel (%p248) target = $region32
        $region31: #{tpu_custom_call.1} parent=11 // pred_region
          _
        $region32: #{tpu_custom_call.1} parent=11 // pred_fallthru
          _
        // Predicated region
        $region33: #{tpu_custom_call.1} parent=11 // pred_check
          %p251 = pneg %p195
        $region34: #{tpu_custom_call.1} parent=11 // pred_check_branch
          %253 = sbr.rel (%p251) target = $region36
        $region35: #{tpu_custom_call.1} parent=11 // pred_region
          _
        $region36: #{tpu_custom_call.1} parent=11 // pred_fallthru
          _
      $region12: #{tpu_custom_call.1} parent=5 // pred_fallthru
        _
      %p254 = scmp.lt.s32.totalorder %s17, 2
      // Predicated region
      $region37: #{tpu_custom_call.1} parent=5 // pred_check
        %p255 = pneg %p254
      $region38: #{tpu_custom_call.1} parent=5 // pred_check_branch
        %257 = sbr.rel (%p255) target = $region40
      $region39: #{tpu_custom_call.1} parent=5 // pred_region
        // Predicated region
        $region41: #{tpu_custom_call.1} parent=39 // pred_check
          %p258 = pneg %p37
        $region42: #{tpu_custom_call.1} parent=39 // pred_check_branch
          %260 = sbr.rel (%p258) target = $region44
        $region43: #{tpu_custom_call.1} parent=39 // pred_region
          %s261 = smul.u32 6, %s17
          %p262 = scmp.lt.s32.totalorder %s261, 11
          %s263 = scalar_select %p262, %s261, 11
          %s264 = smul.addr %s263, 8
          %s265 = scalar_lea.vmem %s0, %s264
          %s266 = smul.u32 6, %s17
        $region44: #{tpu_custom_call.1} parent=39 // pred_fallthru
          _
        // Predicated region
        $region45: #{tpu_custom_call.1} parent=39 // pred_check
          %p267 = pneg %p63
        $region46: #{tpu_custom_call.1} parent=39 // pred_check_branch
          %269 = sbr.rel (%p267) target = $region48
        $region47: #{tpu_custom_call.1} parent=39 // pred_region
          %s270 = smul.u32 6, %s17
          %p271 = scmp.lt.s32.totalorder %s270, 11
          %s272 = scalar_select %p271, %s270, 11
          %s273 = smul.addr %s272, 8
          %s274 = scalar_lea.vmem %s1, %s273
          %s275 = smul.u32 6, %s17
        $region48: #{tpu_custom_call.1} parent=39 // pred_fallthru
          _
      $region40: #{tpu_custom_call.1} parent=5 // pred_fallthru
        _
      %p276 = scmp.le.s32.totalorder 1, %s17
      %p277 = scmp.lt.s32.totalorder %s17, 3
      %p278 = pnand %p276, %p277
      %p279 = pneg %p278
      // Predicated region
      $region49: #{tpu_custom_call.1} parent=5 // pred_check
        _
      $region50: #{tpu_custom_call.1} parent=5 // pred_check_branch
        %281 = sbr.rel (%p278) target = $region52
      $region51: #{tpu_custom_call.1} parent=5 // pred_region
        %s282 = ssub.s32 %s17, 1
        %s283 = smul.u32 6, %s22
        %p284 = scmp.lt.s32.totalorder %s283, 11
        %s285 = scalar_select %p284, %s283, 11
        %s286 = smul.addr %s285, 8
        %s287 = scalar_lea.vmem %s0, %s286
        %p288 = pneg %p43
        %p289 = pneg %p40
        %s290 = smul.u32 6, %s22
        %p291 = scmp.lt.s32.totalorder %s290, 11
        %s292 = scalar_select %p291, %s290, 11
        %s293 = smul.addr %s292, 8
        %s294 = scalar_lea.vmem %s1, %s293
        %p295 = pneg %p69
        %p296 = pneg %p66
        %p297 = pneg %p90
        %p298 = pneg %p87
        %p299 = pneg %p111
        %p300 = pneg %p108
        %p301 = pneg %p132
        %p302 = pneg %p129
        %p303 = pneg %p153
        %p304 = pneg %p150
        %p305 = pneg %p174
        %p306 = pneg %p171
        %p307 = pneg %p195
        %p308 = pneg %p192
        %p309 = pneg %p221
        %p310 = pneg %p218
        %s311 = sand.u32 %s208, 1
        %s312 = scalar_lea.sflag [#allocation3], %s311
        %s313 = sand.u32 %s208, 1
        %s314 = smul.addr %s313, 4
        %s315 = scalar_lea.vmem [#allocation2], %s314
        %s316 = smul.u32 6, %s22
        %p317 = scmp.lt.s32.totalorder %s316, 11
        %s318 = scalar_select %p317, %s316, 11
        %s319 = smul.addr %s318, 8
        %s320 = scalar_lea.vmem %s0, %s319
        %s321 = smul.u32 6, %s22
        %s322 = smul.u32 6, %s22
        %p323 = scmp.lt.s32.totalorder %s322, 11
        %s324 = scalar_select %p323, %s322, 11
        %s325 = smul.addr %s324, 8
        %s326 = scalar_lea.vmem %s1, %s325
        %s327 = smul.u32 6, %s22
        %v328 = vld [vmem:[%s2] sm:$0xff]
        %v329 = vld [vmem:[%s2 + $0x8] sm:$0xff]
        %v330 = vld [vmem:[%s320] sm:$0xff]
        %v331 = vld [vmem:[%s320 + $0x8] sm:$0xff]
        %v332 = vld [vmem:[%s320 + $0x10] sm:$0xff]
        %v333 = vld [vmem:[%s320 + $0x18] sm:$0xff]
        %v334 = vld [vmem:[%s320 + $0x20] sm:$0xff]
        %v335 = vld [vmem:[%s320 + $0x28] sm:$0xff]
        %vm336 = vcmask 130048
        %v338 = vsel %vm336, %v330, 0
        %v341 = vsel %vm336, %v331, 0
        %v344 = vsel %vm336, %v332, 0
        %v347 = vsel %vm336, %v333, 0
        %v350 = vsel %vm336, %v334, 0
        %v353 = vsel %vm336, %v335, 0
        %355 = vmatprep.subr.mxu0 0.0
        %356 = vmatpush1.msra.mxu0 %v328
        %357 = vmatprep.subr.mxu0 0.0
        %358 = vmatpush1.msra.mxu0 %v329
        %359 = vmatprep.subr.mxu0 0.0
        %360 = vmatpush1.msra.mxu0 0.0
        %361 = vmatprep.subr.mxu0 0.0
        %362 = vmatpush1.msra.mxu0 0.0
        %363 = vmatprep.subr.mxu0 0.0
        %364 = vmatpush1.msra.mxu0 0.0
        %365 = vmatprep.subr.mxu0 0.0
        %366 = vmatpush1.msra.mxu0 0.0
        %367 = vmatprep.subr.mxu0 0.0
        %368 = vmatpush1.msra.mxu0 0.0
        %369 = vmatprep.subr.mxu0 0.0
        %370 = vmatpush1.msra.mxu0 0.0
        %371 = vmatprep.subr.mxu0 0.0
        %372 = vmatpush1.msra.mxu0 0.0
        %373 = vmatprep.subr.mxu0 0.0
        %374 = vmatpush1.msra.mxu0 0.0
        %375 = vmatprep.subr.mxu0 0.0
        %376 = vmatpush1.msra.mxu0 0.0
        %377 = vmatprep.subr.mxu0 0.0
        %378 = vmatpush1.msra.mxu0 0.0
        %379 = vmatprep.subr.mxu0 0.0
        %380 = vmatpush1.msra.mxu0 0.0
        %381 = vmatprep.subr.mxu0 0.0
        %382 = vmatpush1.msra.mxu0 0.0
        %383 = vmatprep.subr.mxu0 0.0
        %384 = vmatpush1.msra.mxu0 0.0
        %385 = vmatprep.subr.mxu0 0.0
        %386 = vmatpush1.msra.mxu0 0.0
        %387 = vmatprep.subr.mxu0 0.0
        %388 = vmatpush1.msra.mxu0 0.0
        %389 = vmatprep.subr.mxu0 0.0
        %390 = vmatpush1.msra.mxu0 0.0
        %391 = vmatprep.subr.mxu0 0.0
        %392 = vmatpush1.msra.mxu0 0.0
        %393 = vmatprep.subr.mxu0 0.0
        %394 = vmatpush1.msra.mxu0 0.0
        %395 = vmatprep.subr.mxu0 0.0
        %396 = vmatpush1.msra.mxu0 0.0
        %397 = vmatprep.subr.mxu0 0.0
        %398 = vmatpush1.msra.mxu0 0.0
        %399 = vmatprep.subr.mxu0 0.0
        %400 = vmatpush1.msra.mxu0 0.0
        %401 = vmatprep.subr.mxu0 0.0
        %402 = vmatpush1.msra.mxu0 0.0
        %403 = vmatprep.subr.mxu0 0.0
        %404 = vmatpush1.msra.mxu0 0.0
        %405 = vmatprep.subr.mxu0 0.0
        %406 = vmatpush1.msra.mxu0 0.0
        %407 = vmatprep.subr.mxu0 0.0
        %408 = vmatpush1.msra.mxu0 0.0
        %409 = vmatprep.subr.mxu0 0.0
        %410 = vmatpush1.msra.mxu0 0.0
        %411 = vmatprep.subr.mxu0 0.0
        %412 = vmatpush1.msra.mxu0 0.0
        %413 = vmatprep.subr.mxu0 0.0
        %414 = vmatpush1.msra.mxu0 0.0
        %415 = vmatprep.subr.mxu0 0.0
        %416 = vmatpush1.msra.mxu0 0.0
        %417 = vmatprep.subr.mxu0 0.0
        %418 = vmatpush1.msra.mxu0 0.0
        %419 = vmatprep.mubr.f32.mxu0 0.0
        %420 = vmatmul.mubr.f32.gmra.mrb[0].mxu0 %v338
        %v421 = vpop.f32.mrb[0].mxu0
        %v422 = vadd.f32 0.0, %v421
        %v423 = vpop.f32.mrb[0].mxu0
        %424 = vmatprep.mubr.f32.mxu0 0.0
        %425 = vmatmul.mubr.f32.gmra.mrb[0].mxu0 %v341
        %v426 = vpop.f32.mrb[0].mxu0
        %v427 = vadd.f32 0.0, %v426
        %v428 = vpop.f32.mrb[0].mxu0
        %429 = vmatprep.mubr.f32.mxu0 0.0
        %430 = vmatmul.mubr.f32.gmra.mrb[0].mxu0 %v344
        %v431 = vpop.f32.mrb[0].mxu0
        %v432 = vadd.f32 0.0, %v431
        %v433 = vpop.f32.mrb[0].mxu0
        %434 = vmatprep.mubr.f32.mxu0 0.0
        %435 = vmatmul.mubr.f32.gmra.mrb[0].mxu0 %v347
        %v436 = vpop.f32.mrb[0].mxu0
        %v437 = vadd.f32 0.0, %v436
        %v438 = vpop.f32.mrb[0].mxu0
        %439 = vmatprep.mubr.f32.mxu0 0.0
        %440 = vmatmul.mubr.f32.gmra.mrb[0].mxu0 %v350
        %v441 = vpop.f32.mrb[0].mxu0
        %v442 = vadd.f32 0.0, %v441
        %v443 = vpop.f32.mrb[0].mxu0
        %444 = vmatprep.mubr.f32.mxu0 0.0
        %445 = vmatmul.mubr.f32.gmra.mrb[0].mxu0 %v353
        %v446 = vpop.f32.mrb[0].mxu0
        %v447 = vadd.f32 0.0, %v446
        %v448 = vpop.f32.mrb[0].mxu0
        %449 = vdwg.mxu0
        %v450 = vld [vmem:[%s326] sm:$0xff]
        %v451 = vld [vmem:[%s326 + $0x8] sm:$0xff]
        %v452 = vld [vmem:[%s326 + $0x10] sm:$0xff]
        %v453 = vld [vmem:[%s326 + $0x18] sm:$0xff]
        %v454 = vld [vmem:[%s326 + $0x20] sm:$0xff]
        %v455 = vld [vmem:[%s326 + $0x28] sm:$0xff]
        %v457 = vsel %vm336, %v450, 0
        %v460 = vsel %vm336, %v451, 0
        %v463 = vsel %vm336, %v452, 0
        %v466 = vsel %vm336, %v453, 0
        %v469 = vsel %vm336, %v454, 0
        %v472 = vsel %vm336, %v455, 0
        %474 = vmatprep.subr.mxu0 0.0
        %475 = vmatpush1.msra.mxu0 %v328
        %476 = vmatprep.subr.mxu0 0.0
        %477 = vmatpush1.msra.mxu0 %v329
        %478 = vmatprep.subr.mxu0 0.0
        %479 = vmatpush1.msra.mxu0 0.0
        %480 = vmatprep.subr.mxu0 0.0
        %481 = vmatpush1.msra.mxu0 0.0
        %482 = vmatprep.subr.mxu0 0.0
        %483 = vmatpush1.msra.mxu0 0.0
        %484 = vmatprep.subr.mxu0 0.0
        %485 = vmatpush1.msra.mxu0 0.0
        %486 = vmatprep.subr.mxu0 0.0
        %487 = vmatpush1.msra.mxu0 0.0
        %488 = vmatprep.subr.mxu0 0.0
        %489 = vmatpush1.msra.mxu0 0.0
        %490 = vmatprep.subr.mxu0 0.0
        %491 = vmatpush1.msra.mxu0 0.0
        %492 = vmatprep.subr.mxu0 0.0
        %493 = vmatpush1.msra.mxu0 0.0
        %494 = vmatprep.subr.mxu0 0.0
        %495 = vmatpush1.msra.mxu0 0.0
        %496 = vmatprep.subr.mxu0 0.0
        %497 = vmatpush1.msra.mxu0 0.0
        %498 = vmatprep.subr.mxu0 0.0
        %499 = vmatpush1.msra.mxu0 0.0
        %500 = vmatprep.subr.mxu0 0.0
        %501 = vmatpush1.msra.mxu0 0.0
        %502 = vmatprep.subr.mxu0 0.0
        %503 = vmatpush1.msra.mxu0 0.0
        %504 = vmatprep.subr.mxu0 0.0
        %505 = vmatpush1.msra.mxu0 0.0
        %506 = vmatprep.subr.mxu0 0.0
        %507 = vmatpush1.msra.mxu0 0.0
        %508 = vmatprep.subr.mxu0 0.0
        %509 = vmatpush1.msra.mxu0 0.0
        %510 = vmatprep.subr.mxu0 0.0
        %511 = vmatpush1.msra.mxu0 0.0
        %512 = vmatprep.subr.mxu0 0.0
        %513 = vmatpush1.msra.mxu0 0.0
        %514 = vmatprep.subr.mxu0 0.0
        %515 = vmatpush1.msra.mxu0 0.0
        %516 = vmatprep.subr.mxu0 0.0
        %517 = vmatpush1.msra.mxu0 0.0
        %518 = vmatprep.subr.mxu0 0.0
        %519 = vmatpush1.msra.mxu0 0.0
        %520 = vmatprep.subr.mxu0 0.0
        %521 = vmatpush1.msra.mxu0 0.0
        %522 = vmatprep.subr.mxu0 0.0
        %523 = vmatpush1.msra.mxu0 0.0
        %524 = vmatprep.subr.mxu0 0.0
        %525 = vmatpush1.msra.mxu0 0.0
        %526 = vmatprep.subr.mxu0 0.0
        %527 = vmatpush1.msra.mxu0 0.0
        %528 = vmatprep.subr.mxu0 0.0
        %529 = vmatpush1.msra.mxu0 0.0
        %530 = vmatprep.subr.mxu0 0.0
        %531 = vmatpush1.msra.mxu0 0.0
        %532 = vmatprep.subr.mxu0 0.0
        %533 = vmatpush1.msra.mxu0 0.0
        %534 = vmatprep.subr.mxu0 0.0
        %535 = vmatpush1.msra.mxu0 0.0
        %536 = vmatprep.subr.mxu0 0.0
        %537 = vmatpush1.msra.mxu0 0.0
        %538 = vmatprep.mubr.f32.mxu0 0.0
        %539 = vmatmul.mubr.f32.gmra.mrb[0].mxu0 %v457
        %v540 = vpop.f32.mrb[0].mxu0
        %v541 = vadd.f32 0.0, %v540
        %v542 = vpop.f32.mrb[0].mxu0
        %543 = vmatprep.mubr.f32.mxu0 0.0
        %544 = vmatmul.mubr.f32.gmra.mrb[0].mxu0 %v460
        %v545 = vpop.f32.mrb[0].mxu0
        %v546 = vadd.f32 0.0, %v545
        %v547 = vpop.f32.mrb[0].mxu0
        %548 = vmatprep.mubr.f32.mxu0 0.0
        %549 = vmatmul.mubr.f32.gmra.mrb[0].mxu0 %v463
        %v550 = vpop.f32.mrb[0].mxu0
        %v551 = vadd.f32 0.0, %v550
        %v552 = vpop.f32.mrb[0].mxu0
        %553 = vmatprep.mubr.f32.mxu0 0.0
        %554 = vmatmul.mubr.f32.gmra.mrb[0].mxu0 %v466
        %v555 = vpop.f32.mrb[0].mxu0
        %v556 = vadd.f32 0.0, %v555
        %v557 = vpop.f32.mrb[0].mxu0
        %558 = vmatprep.mubr.f32.mxu0 0.0
        %559 = vmatmul.mubr.f32.gmra.mrb[0].mxu0 %v469
        %v560 = vpop.f32.mrb[0].mxu0
        %v561 = vadd.f32 0.0, %v560
        %v562 = vpop.f32.mrb[0].mxu0
        %563 = vmatprep.mubr.f32.mxu0 0.0
        %564 = vmatmul.mubr.f32.gmra.mrb[0].mxu0 %v472
        %v565 = vpop.f32.mrb[0].mxu0
        %v566 = vadd.f32 0.0, %v565
        %v567 = vpop.f32.mrb[0].mxu0
        %568 = vdwg.mxu0
        %v569 = vsub.f32 %v422, %v541
        %v570 = vsub.f32 %v427, %v546
        %v571 = vsub.f32 %v432, %v551
        %v572 = vsub.f32 %v437, %v556
        %v573 = vsub.f32 %v442, %v561
        %v574 = vsub.f32 %v447, %v566
        %v575 = vld [vmem:[%s3] sm:$0xf]
        %v576 = vld [vmem:[%s4] sm:$0xf]
        %v577 = vld [vmem:[%s5] sm:$0xf]
        %v578 = vld [vmem:[%s6] sm:$0xf]
        %v579 = vld [vmem:[%s7] sm:$0xf]
        %vm580 = vcmask 392192
        %v582 = vsel %vm580, %v575, 0
        %584 = vmatprep.subr.mxu0 0.0
        %585 = vmatpush1.msra.mxu0 %v569
        %586 = vmatprep.subr.mxu0 0.0
        %587 = vmatpush1.msra.mxu0 %v570
        %588 = vmatprep.subr.mxu0 0.0
        %589 = vmatpush1.msra.mxu0 %v571
        %590 = vmatprep.subr.mxu0 0.0
        %591 = vmatpush1.msra.mxu0 %v572
        %592 = vmatprep.subr.mxu0 0.0
        %593 = vmatpush1.msra.mxu0 %v573
        %594 = vmatprep.subr.mxu0 0.0
        %595 = vmatpush1.msra.mxu0 %v574
        %596 = vmatprep.subr.mxu0 0.0
        %597 = vmatpush1.msra.mxu0 0.0
        %598 = vmatprep.subr.mxu0 0.0
        %599 = vmatpush1.msra.mxu0 0.0
        %600 = vmatprep.subr.mxu0 0.0
        %601 = vmatpush1.msra.mxu0 0.0
        %602 = vmatprep.subr.mxu0 0.0
        %603 = vmatpush1.msra.mxu0 0.0
        %604 = vmatprep.subr.mxu0 0.0
        %605 = vmatpush1.msra.mxu0 0.0
        %606 = vmatprep.subr.mxu0 0.0
        %607 = vmatpush1.msra.mxu0 0.0
        %608 = vmatprep.subr.mxu0 0.0
        %609 = vmatpush1.msra.mxu0 0.0
        %610 = vmatprep.subr.mxu0 0.0
        %611 = vmatpush1.msra.mxu0 0.0
        %612 = vmatprep.subr.mxu0 0.0
        %613 = vmatpush1.msra.mxu0 0.0
        %614 = vmatprep.subr.mxu0 0.0
        %615 = vmatpush1.msra.mxu0 0.0
        %616 = vmatprep.subr.mxu0 0.0
        %617 = vmatpush1.msra.mxu0 0.0
        %618 = vmatprep.subr.mxu0 0.0
        %619 = vmatpush1.msra.mxu0 0.0
        %620 = vmatprep.subr.mxu0 0.0
        %621 = vmatpush1.msra.mxu0 0.0
        %622 = vmatprep.subr.mxu0 0.0
        %623 = vmatpush1.msra.mxu0 0.0
        %624 = vmatprep.subr.mxu0 0.0
        %625 = vmatpush1.msra.mxu0 0.0
        %626 = vmatprep.subr.mxu0 0.0
        %627 = vmatpush1.msra.mxu0 0.0
        %628 = vmatprep.subr.mxu0 0.0
        %629 = vmatpush1.msra.mxu0 0.0
        %630 = vmatprep.subr.mxu0 0.0
        %631 = vmatpush1.msra.mxu0 0.0
        %632 = vmatprep.subr.mxu0 0.0
        %633 = vmatpush1.msra.mxu0 0.0
        %634 = vmatprep.subr.mxu0 0.0
        %635 = vmatpush1.msra.mxu0 0.0
        %636 = vmatprep.subr.mxu0 0.0
        %637 = vmatpush1.msra.mxu0 0.0
        %638 = vmatprep.subr.mxu0 0.0
        %639 = vmatpush1.msra.mxu0 0.0
        %640 = vmatprep.subr.mxu0 0.0
        %641 = vmatpush1.msra.mxu0 0.0
        %642 = vmatprep.subr.mxu0 0.0
        %643 = vmatpush1.msra.mxu0 0.0
        %644 = vmatprep.subr.mxu0 0.0
        %645 = vmatpush1.msra.mxu0 0.0
        %646 = vmatprep.subr.mxu0 0.0
        %647 = vmatpush1.msra.mxu0 0.0
        %648 = vmatprep.mubr.f32.mxu0 0.0
        %649 = vmatmul.mubr.f32.gmra.mrb[0].mxu0 %v582
        %v650 = vpop.f32.mrb[0].mxu0
        %v651 = vadd.f32 0.0, %v650
        %v652 = vpop.f32.mrb[0].mxu0
        %653 = vdwg.mxu0
        %vm654 = vcmask 31744
        %v656 = vsel %vm654, %v651, 0
        %vm658 = vcmask 1043456
        %v660 = vsel %vm658, %v576, 0
        %662 = vmatprep.subr.mxu0 0.0
        %663 = vmatpush1.msra.mxu0 %v660
        %664 = vmatprep.subr.mxu0 0.0
        %665 = vmatpush1.msra.mxu0 0.0
        %666 = vmatprep.subr.mxu0 0.0
        %667 = vmatpush1.msra.mxu0 0.0
        %668 = vmatprep.subr.mxu0 0.0
        %669 = vmatpush1.msra.mxu0 0.0
        %670 = vmatprep.subr.mxu0 0.0
        %671 = vmatpush1.msra.mxu0 0.0
        %672 = vmatprep.subr.mxu0 0.0
        %673 = vmatpush1.msra.mxu0 0.0
        %674 = vmatprep.subr.mxu0 0.0
        %675 = vmatpush1.msra.mxu0 0.0
        %676 = vmatprep.subr.mxu0 0.0
        %677 = vmatpush1.msra.mxu0 0.0
        %678 = vmatprep.subr.mxu0 0.0
        %679 = vmatpush1.msra.mxu0 0.0
        %680 = vmatprep.subr.mxu0 0.0
        %681 = vmatpush1.msra.mxu0 0.0
        %682 = vmatprep.subr.mxu0 0.0
        %683 = vmatpush1.msra.mxu0 0.0
        %684 = vmatprep.subr.mxu0 0.0
        %685 = vmatpush1.msra.mxu0 0.0
        %686 = vmatprep.subr.mxu0 0.0
        %687 = vmatpush1.msra.mxu0 0.0
        %688 = vmatprep.subr.mxu0 0.0
        %689 = vmatpush1.msra.mxu0 0.0
        %690 = vmatprep.subr.mxu0 0.0
        %691 = vmatpush1.msra.mxu0 0.0
        %692 = vmatprep.subr.mxu0 0.0
        %693 = vmatpush1.msra.mxu0 0.0
        %694 = vmatprep.subr.mxu0 0.0
        %695 = vmatpush1.msra.mxu0 0.0
        %696 = vmatprep.subr.mxu0 0.0
        %697 = vmatpush1.msra.mxu0 0.0
        %698 = vmatprep.subr.mxu0 0.0
        %699 = vmatpush1.msra.mxu0 0.0
        %700 = vmatprep.subr.mxu0 0.0
        %701 = vmatpush1.msra.mxu0 0.0
        %702 = vmatprep.subr.mxu0 0.0
        %703 = vmatpush1.msra.mxu0 0.0
        %704 = vmatprep.subr.mxu0 0.0
        %705 = vmatpush1.msra.mxu0 0.0
        %706 = vmatprep.subr.mxu0 0.0
        %707 = vmatpush1.msra.mxu0 0.0
        %708 = vmatprep.subr.mxu0 0.0
        %709 = vmatpush1.msra.mxu0 0.0
        %710 = vmatprep.subr.mxu0 0.0
        %711 = vmatpush1.msra.mxu0 0.0
        %712 = vmatprep.subr.mxu0 0.0
        %713 = vmatpush1.msra.mxu0 0.0
        %714 = vmatprep.subr.mxu0 0.0
        %715 = vmatpush1.msra.mxu0 0.0
        %716 = vmatprep.subr.mxu0 0.0
        %717 = vmatpush1.msra.mxu0 0.0
        %718 = vmatprep.subr.mxu0 0.0
        %719 = vmatpush1.msra.mxu0 0.0
        %720 = vmatprep.subr.mxu0 0.0
        %721 = vmatpush1.msra.mxu0 0.0
        %722 = vmatprep.subr.mxu0 0.0
        %723 = vmatpush1.msra.mxu0 0.0
        %724 = vmatprep.subr.mxu0 0.0
        %725 = vmatpush1.msra.mxu0 0.0
        %726 = vmatprep.mubr.f32.mxu0 0.0
        %727 = vmatmul.mubr.f32.gmra.mrb[0].mxu0 %v656
        %v728 = vpop.f32.mrb[0].mxu0
        %v729 = vadd.f32 0.0, %v728
        %v730 = vpop.f32.mrb[0].mxu0
        %731 = vdwg.mxu0
        %v733 = vsel %vm658, %v577, 0
        %735 = vmatprep.subr.mxu0 0.0
        %736 = vmatpush1.msra.mxu0 %v733
        %737 = vmatprep.subr.mxu0 0.0
        %738 = vmatpush1.msra.mxu0 0.0
        %739 = vmatprep.subr.mxu0 0.0
        %740 = vmatpush1.msra.mxu0 0.0
        %741 = vmatprep.subr.mxu0 0.0
        %742 = vmatpush1.msra.mxu0 0.0
        %743 = vmatprep.subr.mxu0 0.0
        %744 = vmatpush1.msra.mxu0 0.0
        %745 = vmatprep.subr.mxu0 0.0
        %746 = vmatpush1.msra.mxu0 0.0
        %747 = vmatprep.subr.mxu0 0.0
        %748 = vmatpush1.msra.mxu0 0.0
        %749 = vmatprep.subr.mxu0 0.0
        %750 = vmatpush1.msra.mxu0 0.0
        %751 = vmatprep.subr.mxu0 0.0
        %752 = vmatpush1.msra.mxu0 0.0
        %753 = vmatprep.subr.mxu0 0.0
        %754 = vmatpush1.msra.mxu0 0.0
        %755 = vmatprep.subr.mxu0 0.0
        %756 = vmatpush1.msra.mxu0 0.0
        %757 = vmatprep.subr.mxu0 0.0
        %758 = vmatpush1.msra.mxu0 0.0
        %759 = vmatprep.subr.mxu0 0.0
        %760 = vmatpush1.msra.mxu0 0.0
        %761 = vmatprep.subr.mxu0 0.0
        %762 = vmatpush1.msra.mxu0 0.0
        %763 = vmatprep.subr.mxu0 0.0
        %764 = vmatpush1.msra.mxu0 0.0
        %765 = vmatprep.subr.mxu0 0.0
        %766 = vmatpush1.msra.mxu0 0.0
        %767 = vmatprep.subr.mxu0 0.0
        %768 = vmatpush1.msra.mxu0 0.0
        %769 = vmatprep.subr.mxu0 0.0
        %770 = vmatpush1.msra.mxu0 0.0
        %771 = vmatprep.subr.mxu0 0.0
        %772 = vmatpush1.msra.mxu0 0.0
        %773 = vmatprep.subr.mxu0 0.0
        %774 = vmatpush1.msra.mxu0 0.0
        %775 = vmatprep.subr.mxu0 0.0
        %776 = vmatpush1.msra.mxu0 0.0
        %777 = vmatprep.subr.mxu0 0.0
        %778 = vmatpush1.msra.mxu0 0.0
        %779 = vmatprep.subr.mxu0 0.0
        %780 = vmatpush1.msra.mxu0 0.0
        %781 = vmatprep.subr.mxu0 0.0
        %782 = vmatpush1.msra.mxu0 0.0
        %783 = vmatprep.subr.mxu0 0.0
        %784 = vmatpush1.msra.mxu0 0.0
        %785 = vmatprep.subr.mxu0 0.0
        %786 = vmatpush1.msra.mxu0 0.0
        %787 = vmatprep.subr.mxu0 0.0
        %788 = vmatpush1.msra.mxu0 0.0
        %789 = vmatprep.subr.mxu0 0.0
        %790 = vmatpush1.msra.mxu0 0.0
        %791 = vmatprep.subr.mxu0 0.0
        %792 = vmatpush1.msra.mxu0 0.0
        %793 = vmatprep.subr.mxu0 0.0
        %794 = vmatpush1.msra.mxu0 0.0
        %795 = vmatprep.subr.mxu0 0.0
        %796 = vmatpush1.msra.mxu0 0.0
        %797 = vmatprep.subr.mxu0 0.0
        %798 = vmatpush1.msra.mxu0 0.0
        %799 = vmatprep.mubr.f32.mxu0 0.0
        %800 = vmatmul.mubr.f32.gmra.mrb[0].mxu0 %v656
        %v801 = vpop.f32.mrb[0].mxu0
        %v802 = vadd.f32 0.0, %v801
        %v803 = vpop.f32.mrb[0].mxu0
        %804 = vdwg.mxu0
        %v806 = vsel %vm654, %v578, 0
        %v808 = vsel %vm658, %v651, 0
        %810 = vmatprep.subr.mxu0 0.0
        %811 = vmatpush1.msra.mxu0 %v808
        %812 = vmatprep.subr.mxu0 0.0
        %813 = vmatpush1.msra.mxu0 0.0
        %814 = vmatprep.subr.mxu0 0.0
        %815 = vmatpush1.msra.mxu0 0.0
        %816 = vmatprep.subr.mxu0 0.0
        %817 = vmatpush1.msra.mxu0 0.0
        %818 = vmatprep.subr.mxu0 0.0
        %819 = vmatpush1.msra.mxu0 0.0
        %820 = vmatprep.subr.mxu0 0.0
        %821 = vmatpush1.msra.mxu0 0.0
        %822 = vmatprep.subr.mxu0 0.0
        %823 = vmatpush1.msra.mxu0 0.0
        %824 = vmatprep.subr.mxu0 0.0
        %825 = vmatpush1.msra.mxu0 0.0
        %826 = vmatprep.subr.mxu0 0.0
        %827 = vmatpush1.msra.mxu0 0.0
        %828 = vmatprep.subr.mxu0 0.0
        %829 = vmatpush1.msra.mxu0 0.0
        %830 = vmatprep.subr.mxu0 0.0
        %831 = vmatpush1.msra.mxu0 0.0
        %832 = vmatprep.subr.mxu0 0.0
        %833 = vmatpush1.msra.mxu0 0.0
        %834 = vmatprep.subr.mxu0 0.0
        %835 = vmatpush1.msra.mxu0 0.0
        %836 = vmatprep.subr.mxu0 0.0
        %837 = vmatpush1.msra.mxu0 0.0
        %838 = vmatprep.subr.mxu0 0.0
        %839 = vmatpush1.msra.mxu0 0.0
        %840 = vmatprep.subr.mxu0 0.0
        %841 = vmatpush1.msra.mxu0 0.0
        %842 = vmatprep.subr.mxu0 0.0
        %843 = vmatpush1.msra.mxu0 0.0
        %844 = vmatprep.subr.mxu0 0.0
        %845 = vmatpush1.msra.mxu0 0.0
        %846 = vmatprep.subr.mxu0 0.0
        %847 = vmatpush1.msra.mxu0 0.0
        %848 = vmatprep.subr.mxu0 0.0
        %849 = vmatpush1.msra.mxu0 0.0
        %850 = vmatprep.subr.mxu0 0.0
        %851 = vmatpush1.msra.mxu0 0.0
        %852 = vmatprep.subr.mxu0 0.0
        %853 = vmatpush1.msra.mxu0 0.0
        %854 = vmatprep.subr.mxu0 0.0
        %855 = vmatpush1.msra.mxu0 0.0
        %856 = vmatprep.subr.mxu0 0.0
        %857 = vmatpush1.msra.mxu0 0.0
        %858 = vmatprep.subr.mxu0 0.0
        %859 = vmatpush1.msra.mxu0 0.0
        %860 = vmatprep.subr.mxu0 0.0
        %861 = vmatpush1.msra.mxu0 0.0
        %862 = vmatprep.subr.mxu0 0.0
        %863 = vmatpush1.msra.mxu0 0.0
        %864 = vmatprep.subr.mxu0 0.0
        %865 = vmatpush1.msra.mxu0 0.0
        %866 = vmatprep.subr.mxu0 0.0
        %867 = vmatpush1.msra.mxu0 0.0
        %868 = vmatprep.subr.mxu0 0.0
        %869 = vmatpush1.msra.mxu0 0.0
        %870 = vmatprep.subr.mxu0 0.0
        %871 = vmatpush1.msra.mxu0 0.0
        %872 = vmatprep.subr.mxu0 0.0
        %873 = vmatpush1.msra.mxu0 0.0
        %874 = vmatprep.mubr.f32.mxu0 0.0
        %875 = vmatmul.mubr.f32.gmra.mrb[0].mxu0 %v806
        %v876 = vpop.f32.mrb[0].mxu0
        %v877 = vadd.f32 0.0, %v876
        %v878 = vpop.f32.mrb[0].mxu0
        %879 = vdwg.mxu0
        %v881 = vsel %vm654, %v579, 0
        %883 = vmatprep.subr.mxu0 0.0
        %884 = vmatpush1.msra.mxu0 %v808
        %885 = vmatprep.subr.mxu0 0.0
        %886 = vmatpush1.msra.mxu0 0.0
        %887 = vmatprep.subr.mxu0 0.0
        %888 = vmatpush1.msra.mxu0 0.0
        %889 = vmatprep.subr.mxu0 0.0
        %890 = vmatpush1.msra.mxu0 0.0
        %891 = vmatprep.subr.mxu0 0.0
        %892 = vmatpush1.msra.mxu0 0.0
        %893 = vmatprep.subr.mxu0 0.0
        %894 = vmatpush1.msra.mxu0 0.0
        %895 = vmatprep.subr.mxu0 0.0
        %896 = vmatpush1.msra.mxu0 0.0
        %897 = vmatprep.subr.mxu0 0.0
        %898 = vmatpush1.msra.mxu0 0.0
        %899 = vmatprep.subr.mxu0 0.0
        %900 = vmatpush1.msra.mxu0 0.0
        %901 = vmatprep.subr.mxu0 0.0
        %902 = vmatpush1.msra.mxu0 0.0
        %903 = vmatprep.subr.mxu0 0.0
        %904 = vmatpush1.msra.mxu0 0.0
        %905 = vmatprep.subr.mxu0 0.0
        %906 = vmatpush1.msra.mxu0 0.0
        %907 = vmatprep.subr.mxu0 0.0
        %908 = vmatpush1.msra.mxu0 0.0
        %909 = vmatprep.subr.mxu0 0.0
        %910 = vmatpush1.msra.mxu0 0.0
        %911 = vmatprep.subr.mxu0 0.0
        %912 = vmatpush1.msra.mxu0 0.0
        %913 = vmatprep.subr.mxu0 0.0
        %914 = vmatpush1.msra.mxu0 0.0
        %915 = vmatprep.subr.mxu0 0.0
        %916 = vmatpush1.msra.mxu0 0.0
        %917 = vmatprep.subr.mxu0 0.0
        %918 = vmatpush1.msra.mxu0 0.0
        %919 = vmatprep.subr.mxu0 0.0
        %920 = vmatpush1.msra.mxu0 0.0
        %921 = vmatprep.subr.mxu0 0.0
        %922 = vmatpush1.msra.mxu0 0.0
        %923 = vmatprep.subr.mxu0 0.0
        %924 = vmatpush1.msra.mxu0 0.0
        %925 = vmatprep.subr.mxu0 0.0
        %926 = vmatpush1.msra.mxu0 0.0
        %927 = vmatprep.subr.mxu0 0.0
        %928 = vmatpush1.msra.mxu0 0.0
        %929 = vmatprep.subr.mxu0 0.0
        %930 = vmatpush1.msra.mxu0 0.0
        %931 = vmatprep.subr.mxu0 0.0
        %932 = vmatpush1.msra.mxu0 0.0
        %933 = vmatprep.subr.mxu0 0.0
        %934 = vmatpush1.msra.mxu0 0.0
        %935 = vmatprep.subr.mxu0 0.0
        %936 = vmatpush1.msra.mxu0 0.0
        %937 = vmatprep.subr.mxu0 0.0
        %938 = vmatpush1.msra.mxu0 0.0
        %939 = vmatprep.subr.mxu0 0.0
        %940 = vmatpush1.msra.mxu0 0.0
        %941 = vmatprep.subr.mxu0 0.0
        %942 = vmatpush1.msra.mxu0 0.0
        %943 = vmatprep.subr.mxu0 0.0
        %944 = vmatpush1.msra.mxu0 0.0
        %945 = vmatprep.subr.mxu0 0.0
        %946 = vmatpush1.msra.mxu0 0.0
        %947 = vmatprep.mubr.f32.mxu0 0.0
        %948 = vmatmul.mubr.f32.gmra.mrb[0].mxu0 %v881
        %v949 = vpop.f32.mrb[0].mxu0
        %v950 = vadd.f32 0.0, %v949
        %v951 = vpop.f32.mrb[0].mxu0
        %952 = vdwg.mxu0
        %v953 = vmul.f32 %v729, %v729
        %v954 = vmul.f32 %v802, %v802
        %v955 = vadd.f32 %v953, %v954
        %v956 = vmul.f32 %v877, %v877
        %v957 = vadd.f32 %v955, %v956
        %v958 = vmul.f32 %v950, %v950
        %v959 = vadd.f32 %v957, %v958
        %vm960 = vcmask 27648
        %961 = vst.msk [vmem:[%s315] sm:$0xf] %vm960, %v959
        %s962 = sand.u32 %s208, 1
        %s963 = scalar_lea.sflag [#allocation3], %s962
        %s964 = sand.u32 %s208, 1
        %s965 = smul.addr %s964, 4
        %s966 = scalar_lea.vmem [#allocation2], %s965
        // Predicated region
        $region53: #{tpu_custom_call.1} parent=51 // pred_check
          %p967 = pneg %p218
        $region54: #{tpu_custom_call.1} parent=51 // pred_check_branch
          %969 = sbr.rel (%p967) target = $region56
        $region55: #{tpu_custom_call.1} parent=51 // pred_region
          %s971 = ssub.s32 64, 64
          %972 = vsyncadd %s963, %s971
          %s973 = smul.addr %s22, 64
          %s974 = scalar_lea.hbm %s8, %s973
          %s976 = sshll.u32 %s966, 4
          %s977 = int_to_ptr.vmem [resolvable:$true] %s976
          %979 = dma.vmem_to_hbm [thread:$0]  %s977, 64, %s974, %s963
        $region56: #{tpu_custom_call.1} parent=51 // pred_fallthru
          _
      $region52: #{tpu_custom_call.1} parent=5 // pred_fallthru
        _
      %p980 = scmp.le.s32.totalorder 2, %s17
      // Predicated region
      $region57: #{tpu_custom_call.1} parent=5 // pred_check
        %p981 = pneg %p980
      $region58: #{tpu_custom_call.1} parent=5 // pred_check_branch
        %983 = sbr.rel (%p981) target = $region60
      $region59: #{tpu_custom_call.1} parent=5 // pred_region
        %s984 = ssub.s32 %s17, 2
        // Predicated region
        $region61: #{tpu_custom_call.1} parent=59 // pred_check
          %p985 = pneg %p224
        $region62: #{tpu_custom_call.1} parent=59 // pred_check_branch
          %987 = sbr.rel (%p985) target = $region64
        $region63: #{tpu_custom_call.1} parent=59 // pred_region
          %s988 = sand.u32 %s209, 1
          %s989 = scalar_lea.sflag [#allocation3], %s988
          %s990 = sand.u32 %s209, 1
          %s991 = smul.addr %s990, 4
          %s992 = scalar_lea.vmem [#allocation2], %s991
          %993 = dma.done %s989, 64
        $region64: #{tpu_custom_call.1} parent=59 // pred_fallthru
          _
      $region60: #{tpu_custom_call.1} parent=5 // pred_fallthru
        _
    $region6: #{tpu_custom_call.1} parent=1 // loop_footer
      %s21 = sadd.s32 1, %s17
    $region7: #{tpu_custom_call.1} parent=1 // loop_footer_branch
      %16 = sbr.rel target = $region3
    $region8: #{tpu_custom_call.1} parent=1 // loop_exit
      _
    %994 = vsyncpa [#allocation3], 1
    %s995 = scalar_lea.sflag [#allocation3], 1
    %996 = vsyncpa %s995, 1

</llo_original>
